<compile_context>
chip_gen: v7x
topology: tpu7x:2x2x1
jax: 0.10.0
libtpu: 0.0.40
codegen_flags: <defaults>
</compile_context>

<pallas_src>
import functools

import jax
import jax.numpy as jnp
from jax import lax
from jax.experimental import pallas as pl
from jax.experimental.pallas import tpu as pltpu

GAMMA = 2  # matches `gamma = 2` in the reference script (integer -> explicit square)


def _round_up(x: int, m: int) -> int:
    return ((x + m - 1) // m) * m


def _vmem_capacity_bytes() -> int:
    # Generation-aware VMEM capacity (v5e/v6e: 128 MiB, v7x: 64 MiB).
    try:
        return int(pltpu.get_tpu_info().vmem_capacity_bytes)
    except Exception:
        return 64 * 1024 * 1024  # conservative fallback (v7x physical VMEM)


def _focal_loss_kernel(logits_ref, targets_ref, out_ref, *, n_rows: int):
    # logits_ref:  (TILE_N, C) native dtype
    # targets_ref: (TILE_N, 1) int32
    # out_ref:     (1, 8, 128) f32 -- per-tile partial sum broadcast lane-dense
    tile_rows, c = logits_ref.shape
    x = logits_ref[...].astype(jnp.float32)      # upcast on the VPU
    t = targets_ref[...]                          # (T, 1) int32

    # Numerically stable softmax pieces -- a single exp pass over (T, C).
    m = jnp.max(x, axis=-1, keepdims=True)        # (T, 1)
    z = x - m
    sumexp = jnp.sum(jnp.exp(z), axis=-1, keepdims=True)   # (T, 1)

    # One-hot "gather" of the target logit (no dynamic gather on TPU).
    class_ids = lax.broadcasted_iota(jnp.int32, x.shape, 1)          # (T, C)
    z_t = jnp.sum(jnp.where(class_ids == t, z, 0.0), axis=-1, keepdims=True)

    ce = jnp.log(sumexp) - z_t                    # -log softmax[target]
    pt = jnp.exp(-ce)                             # softmax[target]
    u = 1.0 - pt
    focal = (u * u) * ce                          # (1 - pt)**GAMMA * ce, GAMMA == 2

    # Mask (a) rows past the true batch size (ragged last block reads undefined
    # VMEM) and (b) ignore_index-style targets outside [0, C).  Select does not
    # propagate NaN/Inf from the unselected branch.
    row = pl.program_id(0) * tile_rows + lax.broadcasted_iota(
        jnp.int32, (tile_rows, 1), 0)
    valid = (row < n_rows) & (t >= 0) & (t < c)
    focal = jnp.where(valid, focal, 0.0)

    # Per-tile partial sum; broadcast it across the aligned (8,128) output block
    # so the store is fully lane-dense.  Wrapper reads [:, 0, 0].
    tile_sum = jnp.sum(focal, axis=0, keepdims=True)        # (1, 1)
    out_ref[...] = jnp.broadcast_to(tile_sum.reshape(1, 1, 1), out_ref.shape)


def focal_loss(logits: jax.Array, targets: jax.Array, *, tile_n: int | None = None
               ) -> jax.Array:
    """Mean focal loss (gamma=2, alpha=None), matching the PyTorch module."""
    n, c = logits.shape
    itemsize = jnp.dtype(logits.dtype).itemsize
    pack = {1: 32, 2: 16, 4: 8}.get(itemsize, 8)   # sublane packing per dtype
    padded_c = _round_up(c, 128)                   # VMEM pads the lane dim to 128

    # Generation-aware VMEM budget for the double-buffered pipeline
    # (2 x logits block + 2 x targets block, lane-padded footprints).
    vmem_cap = _vmem_capacity_bytes()
    row_vmem = padded_c * itemsize + 128 * 4
    vmem_budget = min(vmem_cap // 2, 40 * 1024 * 1024)
    max_rows = max(pack, (vmem_budget // (2 * row_vmem)) // pack * pack)

    if tile_n is None:
        # Target ~2 MiB of lane-padded logits per grid step: large enough to
        # amortize the ~0.35 us per-step overhead, small enough to double-buffer
        # on every generation.
        target_rows = (2 * 1024 * 1024) // (padded_c * itemsize)
        tile_n = max(target_rows, 256)
    tile_n = min(tile_n, max_rows, _round_up(n, pack))
    tile_n = max(pack, (tile_n // pack) * pack)

    num_tiles = pl.cdiv(n, tile_n)                 # ragged last block, no jnp.pad
    targets_2d = targets.astype(jnp.int32).reshape(n, 1)

    kernel = functools.partial(_focal_loss_kernel, n_rows=n)

    partial_sums = pl.pallas_call(
        kernel,
        out_shape=jax.ShapeDtypeStruct((num_tiles, 8, 128), jnp.float32),
        grid_spec=pltpu.PrefetchScalarGridSpec(
            num_scalar_prefetch=0,
            grid=(num_tiles,),
            in_specs=[
                pl.BlockSpec((tile_n, c), lambda i: (i, 0)),   # logits tile (native dtype)
                pl.BlockSpec((tile_n, 1), lambda i: (i, 0)),   # targets tile
            ],
            out_specs=pl.BlockSpec((1, 8, 128), lambda i: (i, 0, 0)),
        ),
        compiler_params=pltpu.CompilerParams(
            # Independent tiles -> v7x 2-TC sharding candidate (see TODO above).
            dimension_semantics=("parallel",),
            vmem_limit_bytes=int(min(vmem_cap * 3 // 4, 64 * 1024 * 1024)),
        ),
        cost_estimate=pl.CostEstimate(
            flops=6 * n * c,
            transcendentals=n * (c + 2),
            bytes_accessed=n * c * itemsize + n * 4 + num_tiles * 8 * 128 * 4,
        ),
    )(logits, targets_2d)

    # reduction='mean' over the true batch: the module applies .mean() to the
    # per-row focal tensor, so masked/ignored rows contribute 0 and the
    # denominator is the full N (matches PyTorch semantics exactly).
    return jnp.sum(partial_sums[:, 0, 0]) / jnp.float32(n)


def _reference_focal_loss(logits, targets):
    # Pure-JAX reference mirroring torch.nn.functional.cross_entropy + focal transform.
    logp = jax.nn.log_softmax(logits.astype(jnp.float32), axis=-1)
    ce = -jnp.take_along_axis(logp, targets[:, None].astype(jnp.int32), axis=-1)[:, 0]
    pt = jnp.exp(-ce)
    return jnp.mean((1.0 - pt) ** GAMMA * ce)


if __name__ == "__main__":
    key = jax.random.PRNGKey(0)
    k1, k2, k3, k4 = jax.random.split(key, 4)

    # Small shapes consistent with the module: batch of class logits.
    N, C = 8, 16
    logits = jax.random.normal(k1, (N, C), dtype=jnp.float32)
    targets = jax.random.randint(k2, (N,), 0, C, dtype=jnp.int32)

    loss = focal_loss(logits, targets)
    jax.block_until_ready(loss)
    ref = _reference_focal_loss(logits, targets)
    assert jnp.allclose(loss, ref, rtol=1e-5, atol=1e-5), (loss, ref)

    # Exercise the multi-tile grid + ragged last block masking path (no padding).
    N2, C2 = 21, 16
    logits2 = jax.random.normal(k3, (N2, C2), dtype=jnp.float32)
    targets2 = jax.random.randint(k4, (N2,), 0, C2, dtype=jnp.int32)
    loss2 = focal_loss(logits2, targets2, tile_n=8)  # 3 tiles, last tile ragged (5 rows)
    jax.block_until_ready(loss2)
    ref2 = _reference_focal_loss(logits2, targets2)
    assert jnp.allclose(loss2, ref2, rtol=1e-5, atol=1e-5), (loss2, ref2)

    print("KERNEL_OK")
</pallas_src>

<mosaic_0001>
module attributes {stable_mosaic.version = 11 : i64} {
  func.func @_focal_loss_kernel(%arg0: i32, %arg1: memref<8x16xf32, #tpu.memory_space<vmem>>, %arg2: memref<8x1xi32, #tpu.memory_space<vmem>>, %arg3: memref<1x8x128xf32, #tpu.memory_space<vmem>>) attributes {dimension_semantics = [#tpu.dimension_semantics<parallel>], iteration_bounds = array<i64: 1>, scalar_prefetch = 0 : i64, scratch_operands = 0 : i64, tpu.core_type = #tpu.core_type<tc>, window_params = [{transform_indices = @transform_0, window_bounds = array<i64: 8, 16>}, {transform_indices = @transform_1, window_bounds = array<i64: 8, 1>}, {transform_indices = @transform_2, window_bounds = array<i64: 1, 8, 128>}]} {
    %c0 = arith.constant 0 : index
    %c0_0 = arith.constant 0 : index
    %0 = vector.load %arg1[%c0, %c0_0] : memref<8x16xf32, #tpu.memory_space<vmem>>, vector<8x16xf32>
    %c0_1 = arith.constant 0 : index
    %c0_2 = arith.constant 0 : index
    %1 = vector.load %arg2[%c0_1, %c0_2] : memref<8x1xi32, #tpu.memory_space<vmem>>, vector<8x1xi32>
    %cst = arith.constant dense<0xFF800000> : vector<8xf32>
    %2 = vector.multi_reduction <maximumf>, %0, %cst [1] : vector<8x16xf32> to vector<8xf32>
    %3 = vector.shape_cast %2 : vector<8xf32> to vector<8x1xf32>
    %4 = vector.broadcast %3 : vector<8x1xf32> to vector<8x16xf32>
    %5 = arith.subf %0, %4 : vector<8x16xf32>
    %6 = math.exp %5 : vector<8x16xf32>
    %cst_3 = arith.constant dense<0.000000e+00> : vector<8xf32>
    %7 = vector.multi_reduction <add>, %6, %cst_3 [1] : vector<8x16xf32> to vector<8xf32>
    %8 = vector.shape_cast %7 : vector<8xf32> to vector<8x1xf32>
    %9 = tpu.iota {dimensions = array<i32: 1>} : vector<8x16xi32>
    %10 = vector.broadcast %1 : vector<8x1xi32> to vector<8x16xi32>
    %11 = arith.cmpi eq, %9, %10 : vector<8x16xi32>
    %cst_4 = arith.constant 0.000000e+00 : f32
    %12 = vector.broadcast %cst_4 : f32 to vector<8x16xf32>
    %13 = arith.select %11, %5, %12 : vector<8x16xi1>, vector<8x16xf32>
    %cst_5 = arith.constant dense<0.000000e+00> : vector<8xf32>
    %14 = vector.multi_reduction <add>, %13, %cst_5 [1] : vector<8x16xf32> to vector<8xf32>
    %15 = vector.shape_cast %14 : vector<8xf32> to vector<8x1xf32>
    %16 = math.log %8 : vector<8x1xf32>
    %17 = arith.subf %16, %15 : vector<8x1xf32>
    %cst_6 = arith.constant 0.000000e+00 : f32
    %18 = vector.broadcast %cst_6 : f32 to vector<8x1xf32>
    %19 = arith.subf %18, %17 : vector<8x1xf32>
    %20 = math.exp %19 : vector<8x1xf32>
    %cst_7 = arith.constant 1.000000e+00 : f32
    %21 = vector.broadcast %cst_7 : f32 to vector<8x1xf32>
    %22 = arith.subf %21, %20 : vector<8x1xf32>
    %23 = arith.mulf %22, %22 : vector<8x1xf32>
    %24 = arith.mulf %23, %17 : vector<8x1xf32>
    %c8_i32 = arith.constant 8 : i32
    %25 = arith.muli %arg0, %c8_i32 : i32
    %26 = tpu.iota {dimensions = array<i32: 0>} : vector<8x1xi32>
    %27 = vector.broadcast %25 : i32 to vector<8x1xi32>
    %28 = arith.addi %27, %26 : vector<8x1xi32>
    %c8_i32_8 = arith.constant 8 : i32
    %29 = vector.broadcast %c8_i32_8 : i32 to vector<8x1xi32>
    %30 = arith.cmpi slt, %28, %29 : vector<8x1xi32>
    %c0_i32 = arith.constant 0 : i32
    %31 = vector.broadcast %c0_i32 : i32 to vector<8x1xi32>
    %32 = arith.cmpi sge, %1, %31 : vector<8x1xi32>
    %33 = arith.andi %30, %32 : vector<8x1xi1>
    %c16_i32 = arith.constant 16 : i32
    %34 = vector.broadcast %c16_i32 : i32 to vector<8x1xi32>
    %35 = arith.cmpi slt, %1, %34 : vector<8x1xi32>
    %36 = arith.andi %33, %35 : vector<8x1xi1>
    %cst_9 = arith.constant 0.000000e+00 : f32
    %37 = vector.broadcast %cst_9 : f32 to vector<8x1xf32>
    %38 = arith.select %36, %24, %37 : vector<8x1xi1>, vector<8x1xf32>
    %cst_10 = arith.constant dense<0.000000e+00> : vector<1xf32>
    %39 = vector.multi_reduction <add>, %38, %cst_10 [0] : vector<8x1xf32> to vector<1xf32>
    %40 = vector.shape_cast %39 : vector<1xf32> to vector<1x1xf32>
    %41 = vector.shape_cast %40 : vector<1x1xf32> to vector<1x1x1xf32>
    %42 = vector.shape_cast %41 : vector<1x1x1xf32> to vector<1x1x1xf32>
    %43 = vector.broadcast %42 : vector<1x1x1xf32> to vector<1x8x128xf32>
    %c0_11 = arith.constant 0 : index
    %c0_12 = arith.constant 0 : index
    %c0_13 = arith.constant 0 : index
    %44 = vector.load %arg3[%c0_11, %c0_12, %c0_13] : memref<1x8x128xf32, #tpu.memory_space<vmem>>, vector<1x8x128xf32>
    tpu.vector_store %arg3[%c0_11, %c0_12, %c0_13], %43 {strides = array<i32>} : memref<1x8x128xf32, #tpu.memory_space<vmem>>, vector<1x8x128xf32>,
    return
  }
  func.func @transform_0(%arg0: i32) -> (i32, i32) {
    %c0_i32 = arith.constant 0 : i32
    %c0_i32_0 = arith.constant 0 : i32
    return %arg0, %c0_i32 : i32, i32
  }
  func.func @transform_1(%arg0: i32) -> (i32, i32) {
    %c0_i32 = arith.constant 0 : i32
    %c0_i32_0 = arith.constant 0 : i32
    return %arg0, %c0_i32 : i32, i32
  }
  func.func @transform_2(%arg0: i32) -> (i32, i32, i32) {
    %c0_i32 = arith.constant 0 : i32
    %c0_i32_0 = arith.constant 0 : i32
    %c0_i32_1 = arith.constant 0 : i32
    return %arg0, %c0_i32, %c0_i32_0 : i32, i32, i32
  }
}

</mosaic_0001>

<llo_original>
// kernel: tpu_custom_call.1
$region0: #{tpu_custom_call.1}
  #allocation0 [shape = 'u32[]', space=smem, size = 0x4, offset = 0x4, fixed_abs, tag = 'smem constant byte address 0x4 - core index']
  #allocation1 [shape = 'u32[144,128]{1,0:T(1,128)}', space=vmem, size = 0x12000, scoped, tag = 'internal scratch']
  %s0 = inlined_call_operand.vmem [shape: f32[8,16], index: 0, kind: input, shape index: {}]
  %s1 = inlined_call_operand.vmem [shape: s32[8,1], index: 1, kind: input, shape index: {}]
  %s2 = inlined_call_operand.hbm [shape: f32[1,8,128], index: 2, kind: output, shape index: {}]
  %s3 = sld [smem:[#allocation0]]
  $region18: #{tpu_custom_call.1} parent=0
    _
  %s5 = ssub.s32 1, %s3
  %s6 = scalar_select 0, %s5, %s3
  $region1: #{tpu_custom_call.1} parent=0
    #allocation2 [shape = 'u8[4096]{0}', space=vmem, size = 0x1000, scoped, tag = 'output window, operand 0, single buffered']
    #allocation3 [shape = 's32[1]{0}', space=sflag, size = 0x4, scoped, tag = 'scoped memory for tpu_custom_call.1']
    %7 = vsyncpa [#allocation3], 0
    // Predicated region
    $region2: #{tpu_custom_call.1} parent=1 // pred_check
      _
    $region3: #{tpu_custom_call.1} parent=1 // pred_check_branch
      %9 = sbr.rel (0) target = $region5
    $region4: #{tpu_custom_call.1} parent=1 // pred_region
      _
    $region5: #{tpu_custom_call.1} parent=1 // pred_fallthru
      _
    // Predicated region
    $region6: #{tpu_custom_call.1} parent=1 // pred_check
      _
    $region7: #{tpu_custom_call.1} parent=1 // pred_check_branch
      %11 = sbr.rel (0) target = $region9
    $region8: #{tpu_custom_call.1} parent=1 // pred_region
      _
    $region9: #{tpu_custom_call.1} parent=1 // pred_fallthru
      _
    %v12 = vld [vmem:[%s0] sm:$0xff]
    %v13 = vld [vmem:[%s1] sm:$0xff]
    %vm14 = vcmask 130048
    %v15 = vsel %vm14, %v12, -inf
    %16 = vmax.xlane.f32.xlu0 %v15
    %v17 = vpop.xlane.xlu0 %16
    %v18 = vsub.f32 %v12, %v17
    %v19 = vmul.f32 %v18, 1.442695
    %v20 = vpow.pop %v19
    %v21 = vsel %vm14, %v20, 0.0
    %22 = vadd.xlane.f32.xlu0 %v21
    %v23 = vpop.xlane.xlu0 %22
    %v24 = vlaneseq
    %v25 = vand.u32 %v24, 127
    %26 = vset.pattern.permute.xlu0 0
    %27 = vperm.xlu0 %26, %v13
    %v28 = vpop.permute.xlu0 %27
    %vm29 = vcmp.eq.s32.totalorder %v25, %v28
    %v30 = vsel %vm29, %v18, 0.0
    %v31 = vsel %vm14, %v30, 0.0
    %32 = vadd.xlane.f32.xlu0 %v31
    %v33 = vpop.xlane.xlu0 %32
    %v34 = vlog2.pop %v23
    %v35 = vmul.f32 %v34, 0.6931472
    %v36 = vsub.f32 %v35, %v33
    %v37 = vsub.f32 0.0, %v36
    %v38 = vmul.f32 %v37, 1.442695
    %v39 = vpow.pop %v38
    %v40 = vsub.f32 1.0, %v39
    %v41 = vmul.f32 %v40, %v40
    %v42 = vmul.f32 %v41, %v36
    %s43 = smul.u32 0, 8
    %v44 = vlaneseq
    %v45 = vshrl.u32 %v44, 7
    %v46 = vstv %s43
    %v47 = vadd.s32 %v46, %v45
    %vm48 = vcmp.lt.s32.totalorder %v47, 8
    %vm49 = vcmp.ge.s32.totalorder %v13, 0
    %vm50 = vmand %vm48, %vm49
    %vm51 = vcmp.lt.s32.totalorder %v13, 16
    %vm52 = vmand %vm50, %vm51
    %v53 = vsel %vm52, %v42, 0.0
    %vm54 = vcmask 7168
    %v55 = vsel %vm54, %v53, 0.0
    %v56 = vrot.slane %v55, 4
    %v57 = vadd.f32 %v55, %v56
    %v58 = vrot.slane %v57, 2
    %v59 = vadd.f32 %v57, %v58
    %v60 = vrot.slane %v59, 1
    %v61 = vadd.f32 %v59, %v60
    %63 = vset.pattern.permute.xlu0 0
    %64 = vperm.xlu0 %63, %v61
    %v65 = vpop.permute.xlu0 %64
    %67 = vst [vmem:[#allocation2] sm:$0xff] %v65
    // Predicated region
    $region10: #{tpu_custom_call.1} parent=1 // pred_check
      _
    $region11: #{tpu_custom_call.1} parent=1 // pred_check_branch
      %69 = sbr.rel (0) target = $region13
    $region12: #{tpu_custom_call.1} parent=1 // pred_region
      %s71 = ssub.s32 128, 128
      %72 = vsyncadd [#allocation3], %s71
      %s74 = sshll.u32 [#allocation2], 4
      %s75 = int_to_ptr.vmem [resolvable:$true] %s74
      %77 = dma.vmem_to_hbm [thread:$0]  %s75, 128, %s2, [#allocation3]
    $region13: #{tpu_custom_call.1} parent=1 // pred_fallthru
      _
    // Predicated region
    $region14: #{tpu_custom_call.1} parent=1 // pred_check
      _
    $region15: #{tpu_custom_call.1} parent=1 // pred_check_branch
      %79 = sbr.rel (0) target = $region17
    $region16: #{tpu_custom_call.1} parent=1 // pred_region
      %80 = dma.done [#allocation3], 128
    $region17: #{tpu_custom_call.1} parent=1 // pred_fallthru
      _
    %81 = vsyncpa [#allocation3], 1

</llo_original>
